<compile_context>
chip_gen: v5e
topology: v5e:2x2
jax: 0.10.0
libtpu: 0.0.40
codegen_flags: <defaults>
</compile_context>

<pallas_src>
import functools

import jax
import jax.numpy as jnp
import numpy as np
from jax.experimental import pallas as pl
from jax.experimental.pallas import tpu as pltpu


def _upconv_block_kernel(x_ref, w_ref, comb_ref, combt_ref, o_ref, *, inv_hw):
    # x_ref:     (Nb, Ho, Kc_pad)      pre-staged windowed LHS (compute dtype)
    # w_ref:     (Kc_pad, Cout*Wo)     fused block-Toeplitz weights (constant map)
    # comb_ref:  (Cout*Wo, Cout)       lane-group -> channel selection matrix (f32)
    # combt_ref: (Cout, Cout*Wo)       channel -> lane-group broadcast matrix (f32)
    # o_ref:     (Nb, Ho, Cout*Wo)     lane-dense output tile (f32)
    Nb, Ho, WC = o_ref.shape

    # Single fused conv matmul on the MXU, f32 accumulation.
    lhs = x_ref[...].reshape(Nb * Ho, x_ref.shape[-1])
    acc = jnp.dot(lhs, w_ref[...], preferred_element_type=jnp.float32)
    acc3 = acc.reshape(Nb, Ho, WC)

    # InstanceNorm2d (no affine, biased variance, eps=1e-5), per image+channel.
    # Stats ride the MXU: stack [sum; sum_sq] -> one comb matmul, then
    # stack [mean; inv_std] -> one broadcast-back matmul.
    col_sum = jnp.sum(acc3, axis=1)                                  # (Nb, WC)
    col_sq = jnp.sum(acc3 * acc3, axis=1)                            # (Nb, WC)
    stats = jnp.concatenate([col_sum, col_sq], axis=0)               # (2Nb, WC)
    stats_c = jnp.dot(stats, comb_ref[...],
                      preferred_element_type=jnp.float32) * inv_hw   # (2Nb, Cout)
    mean_c = stats_c[:Nb]
    var_c = jnp.maximum(stats_c[Nb:] - mean_c * mean_c, 0.0)         # clamp >= 0
    inv_c = jax.lax.rsqrt(var_c + 1e-5)
    bcast = jnp.dot(jnp.concatenate([mean_c, inv_c], axis=0), combt_ref[...],
                    preferred_element_type=jnp.float32)              # (2Nb, WC)
    mean_b = bcast[:Nb][:, None, :]
    inv_b = bcast[Nb:][:, None, :]

    y = jnp.maximum((acc3 - mean_b) * inv_b, 0.0)                    # ReLU
    o_ref[...] = y.astype(o_ref.dtype)


def upconv2d_block(x, weight, skip=None, *, kernel_size, stride, padding,
                   compute_dtype=jnp.bfloat16, images_per_block=1):
    """Forward pass of UpConv2dBlock (norm='in', relu, replicate pad, nearest x2).

    x:      (N, Cin, H, W) float32 (NCHW, like PyTorch)
    weight: (Cout, Cin_total, K, K) (OIHW; Cin_total includes skip channels)
    skip:   optional (N, Cskip, 2H, 2W), concatenated on channels after upsample.
    """
    N, Cin, H, W = x.shape
    K = kernel_size
    Cout = weight.shape[0]

    if skip is None:
        # Fold the W-direction nearest-upsample into the Toeplitz weights; only
        # the H-direction upsample is materialized.
        up_w = 2
        x_sp = jnp.transpose(x, (0, 2, 3, 1))            # (N, H, W, Cin)
        x_sp = jnp.repeat(x_sp, 2, axis=1)               # (N, 2H, W, Cin)
        Win = W
        Cin_t = Cin
    else:
        # Skip path: upsample fully, concat channels; column map has no //2.
        up_w = 1
        x_up = jnp.repeat(jnp.repeat(x, 2, axis=2), 2, axis=3)
        x_cat = jnp.concatenate([x_up, skip], axis=1)    # (N, Ct, 2H, 2W)
        x_sp = jnp.transpose(x_cat, (0, 2, 3, 1))        # (N, 2H, 2W, Ct)
        Win = 2 * W
        Cin_t = x_cat.shape[1]

    # Replication pad along H only (W pad is folded into the Toeplitz weights).
    x_sp = jnp.pad(x_sp, ((0, 0), (padding, padding), (0, 0), (0, 0)), mode="edge")
    Ho = (2 * H + 2 * padding - K) // stride + 1
    Wo = (2 * W + 2 * padding - K) // stride + 1

    WinCin = Win * Cin_t
    Kc = K * WinCin
    Kc_pad = ((Kc + 127) // 128) * 128                   # lane-aligned contraction

    # ---- Pre-stage the fused-matmul LHS: (N, Ho, K*Win*Cin), zero-padded ----
    x_flat = x_sp.reshape(N, -1, WinCin)
    lhs = jnp.stack(
        [x_flat[:, kh:kh + (Ho - 1) * stride + 1:stride, :] for kh in range(K)],
        axis=2).reshape(N, Ho, Kc)
    lhs = jnp.pad(lhs, ((0, 0), (0, 0), (0, Kc_pad - Kc))).astype(compute_dtype)

    # ---- Block-Toeplitz weights: fold W-upsample + replicate-pad + stride ----
    # colmap[kw, wo] = original column feeding output column wo through tap kw.
    # Output columns are channel-major: lane = c*Wo + wo.
    kw_idx = np.arange(K)[:, None]
    wo_idx = np.arange(Wo)[None, :]
    colmap = np.clip(wo_idx * stride + kw_idx - padding, 0, Win * up_w - 1) // up_w
    S = np.zeros((K, Win, Wo), np.float32)
    S[np.broadcast_to(kw_idx, (K, Wo)), colmap,
      np.broadcast_to(wo_idx, (K, Wo))] = 1.0
    w_t = jnp.transpose(weight, (2, 3, 1, 0))            # (K, K, Cin_t, Cout)
    bdw = jnp.einsum("kxw,hkio->hxiow", jnp.asarray(S), w_t)  # (K,Win,Cin,Cout,Wo)
    bdw = bdw.reshape(Kc, Cout * Wo)
    bdw = jnp.pad(bdw, ((0, Kc_pad - Kc), (0, 0))).astype(compute_dtype)

    # Comb matrices for per-channel InstanceNorm stats (channel-major lanes).
    lane = np.arange(Cout * Wo)
    comb_np = (lane[:, None] // Wo == np.arange(Cout)[None, :]).astype(np.float32)
    comb = jnp.asarray(comb_np)                          # (Cout*Wo, Cout)
    combt = jnp.asarray(comb_np.T.copy())                # (Cout, Cout*Wo)

    Nb = images_per_block
    assert N % Nb == 0, "images_per_block must divide the batch size"
    kernel = functools.partial(_upconv_block_kernel, inv_hw=1.0 / float(Ho * Wo))

    out_flat = pl.pallas_call(
        kernel,
        out_shape=jax.ShapeDtypeStruct((N, Ho, Cout * Wo), jnp.float32),
        grid_spec=pltpu.PrefetchScalarGridSpec(
            num_scalar_prefetch=0,
            grid=(N // Nb,),
            in_specs=[
                pl.BlockSpec((Nb, Ho, Kc_pad), lambda n: (n, 0, 0)),
                pl.BlockSpec((Kc_pad, Cout * Wo), lambda n: (0, 0)),
                pl.BlockSpec((Cout * Wo, Cout), lambda n: (0, 0)),
                pl.BlockSpec((Cout, Cout * Wo), lambda n: (0, 0)),
            ],
            out_specs=pl.BlockSpec((Nb, Ho, Cout * Wo), lambda n: (n, 0, 0)),
        ),
        compiler_params=pltpu.CompilerParams(
            dimension_semantics=("parallel",),
            vmem_limit_bytes=32 * 1024 * 1024,
        ),
    )(lhs, bdw, comb, combt)

    # Channel-major lanes -> reshape + major-dims-only transpose to NCHW.
    out = out_flat.reshape(N, Ho, Cout, Wo)
    return jnp.transpose(out, (0, 2, 1, 3))              # (N, Cout, Ho, Wo)


def upconv2d_block_reference(x, weight, skip=None, *, kernel_size, stride, padding):
    """Pure-JAX reference (mirrors the PyTorch module forward)."""
    x = jnp.repeat(jnp.repeat(x, 2, axis=2), 2, axis=3)
    if skip is not None:
        x = jnp.concatenate([x, skip], axis=1)
    x = jnp.pad(x, ((0, 0), (0, 0), (padding, padding), (padding, padding)),
                mode="edge")
    y = jax.lax.conv_general_dilated(
        x, weight, (stride, stride), "VALID",
        dimension_numbers=("NCHW", "OIHW", "NCHW"))
    mean = jnp.mean(y, axis=(2, 3), keepdims=True)
    var = jnp.mean((y - mean) ** 2, axis=(2, 3), keepdims=True)
    y = (y - mean) * jax.lax.rsqrt(var + 1e-5)           # InstanceNorm2d
    return jnp.maximum(y, 0.0)                           # ReLU


if __name__ == "__main__":
    # UpConv2dBlock(input_dim=4, output_dim=8, kernel_size=3, stride=1,
    #               padding=1) with default norm/activation/pad/up_mode.
    N, Cin, H, W = 2, 4, 16, 16
    Cout, K, stride, padding = 8, 3, 1, 1

    key = jax.random.PRNGKey(0)
    kx, kw, ks, kw2 = jax.random.split(key, 4)
    x = jax.random.normal(kx, (N, Cin, H, W), dtype=jnp.float32)
    # Conv2d has bias=False (norm='in' != 'IN').
    weight = jax.random.normal(kw, (Cout, Cin, K, K), dtype=jnp.float32) * 0.1

    ref = upconv2d_block_reference(
        x, weight, kernel_size=K, stride=stride, padding=padding)

    # f32 compute path: tight check against the PyTorch-equivalent reference.
    fwd_f32 = jax.jit(functools.partial(
        upconv2d_block, kernel_size=K, stride=stride, padding=padding,
        compute_dtype=jnp.float32))
    out_f32 = fwd_f32(x, weight)
    jax.block_until_ready(out_f32)
    assert out_f32.shape == (N, Cout, 2 * H, 2 * W), out_f32.shape
    np.testing.assert_allclose(np.asarray(out_f32), np.asarray(ref),
                               rtol=1e-4, atol=1e-4)

    # bf16 fast path (default): looser tolerance accounts for bf16 rounding of
    # the MXU inputs; accumulation and InstanceNorm stay in f32.
    fwd = jax.jit(functools.partial(
        upconv2d_block, kernel_size=K, stride=stride, padding=padding))
    out = fwd(x, weight)
    jax.block_until_ready(out)
    assert out.shape == (N, Cout, 2 * H, 2 * W), out.shape
    np.testing.assert_allclose(np.asarray(out), np.asarray(ref),
                               rtol=2e-2, atol=2e-2)

    # Skip path (channel concat after upsample), f32 check.
    Cskip = 4
    skip = jax.random.normal(ks, (N, Cskip, 2 * H, 2 * W), dtype=jnp.float32)
    weight2 = jax.random.normal(
        kw2, (Cout, Cin + Cskip, K, K), dtype=jnp.float32) * 0.1
    ref2 = upconv2d_block_reference(
        x, weight2, skip, kernel_size=K, stride=stride, padding=padding)
    fwd_skip = jax.jit(functools.partial(
        upconv2d_block, kernel_size=K, stride=stride, padding=padding,
        compute_dtype=jnp.float32))
    out2 = fwd_skip(x, weight2, skip)
    jax.block_until_ready(out2)
    assert out2.shape == (N, Cout, 2 * H, 2 * W), out2.shape
    np.testing.assert_allclose(np.asarray(out2), np.asarray(ref2),
                               rtol=1e-4, atol=1e-4)

    print("KERNEL_OK")
</pallas_src>

<mosaic_0001>
module attributes {stable_mosaic.version = 11 : i64} {
  func.func @_upconv_block_kernel(%arg0: i32, %arg1: memref<1x32x256xf32, #tpu.memory_space<vmem>>, %arg2: memref<256x256xf32, #tpu.memory_space<vmem>>, %arg3: memref<256x8xf32, #tpu.memory_space<vmem>>, %arg4: memref<8x256xf32, #tpu.memory_space<vmem>>, %arg5: memref<1x32x256xf32, #tpu.memory_space<vmem>>) attributes {dimension_semantics = [#tpu.dimension_semantics<parallel>], iteration_bounds = array<i64: 2>, scalar_prefetch = 0 : i64, scratch_operands = 0 : i64, tpu.core_type = #tpu.core_type<tc>, window_params = [{transform_indices = @transform_0, window_bounds = array<i64: 1, 32, 256>}, {pipeline_mode = #tpu.pipeline_mode<synchronous>, transform_indices = @transform_1, window_bounds = array<i64: 256, 256>}, {pipeline_mode = #tpu.pipeline_mode<synchronous>, transform_indices = @transform_2, window_bounds = array<i64: 256, 8>}, {pipeline_mode = #tpu.pipeline_mode<synchronous>, transform_indices = @transform_3, window_bounds = array<i64: 8, 256>}, {transform_indices = @transform_4, window_bounds = array<i64: 1, 32, 256>}]} {
    %c0 = arith.constant 0 : index
    %c0_0 = arith.constant 0 : index
    %c0_1 = arith.constant 0 : index
    %0 = vector.load %arg1[%c0, %c0_0, %c0_1] : memref<1x32x256xf32, #tpu.memory_space<vmem>>, vector<1x32x256xf32>
    %1 = vector.shape_cast %0 : vector<1x32x256xf32> to vector<32x256xf32>
    %c0_2 = arith.constant 0 : index
    %c0_3 = arith.constant 0 : index
    %2 = vector.load %arg2[%c0_2, %c0_3] : memref<256x256xf32, #tpu.memory_space<vmem>>, vector<256x256xf32>
    %cst = arith.constant dense<0.000000e+00> : vector<32x256xf32>
    %3 = tpu.matmul %1, %2, %cst {dimension_numbers = #tpu.dot_dimension_numbers<[1], [0], [0], [1], [0, 0, 1, 1], [], []>} : vector<32x256xf32>, vector<256x256xf32>, vector<32x256xf32> -> vector<32x256xf32>
    %4 = vector.shape_cast %3 : vector<32x256xf32> to vector<1x32x256xf32>
    %cst_4 = arith.constant dense<0.000000e+00> : vector<1x256xf32>
    %5 = vector.multi_reduction <add>, %4, %cst_4 [1] : vector<1x32x256xf32> to vector<1x256xf32>
    %6 = arith.mulf %4, %4 : vector<1x32x256xf32>
    %cst_5 = arith.constant dense<0.000000e+00> : vector<1x256xf32>
    %7 = vector.multi_reduction <add>, %6, %cst_5 [1] : vector<1x32x256xf32> to vector<1x256xf32>
    %8 = tpu.concatenate %5, %7 in 0 : vector<1x256xf32>, vector<1x256xf32> -> vector<2x256xf32>
    %c0_6 = arith.constant 0 : index
    %c0_7 = arith.constant 0 : index
    %9 = vector.load %arg3[%c0_6, %c0_7] : memref<256x8xf32, #tpu.memory_space<vmem>>, vector<256x8xf32>
    %cst_8 = arith.constant dense<0.000000e+00> : vector<2x8xf32>
    %10 = tpu.matmul %8, %9, %cst_8 {dimension_numbers = #tpu.dot_dimension_numbers<[1], [0], [0], [1], [0, 0, 1, 1], [], []>} : vector<2x256xf32>, vector<256x8xf32>, vector<2x8xf32> -> vector<2x8xf32>
    %cst_9 = arith.constant 9.765625E-4 : f32
    %11 = vector.broadcast %cst_9 : f32 to vector<2x8xf32>
    %12 = arith.mulf %10, %11 : vector<2x8xf32>
    %13 = vector.extract_strided_slice %12 {offsets = [0, 0], sizes = [1, 8], strides = [1, 1]} : vector<2x8xf32> to vector<1x8xf32>
    %14 = vector.extract_strided_slice %12 {offsets = [1, 0], sizes = [1, 8], strides = [1, 1]} : vector<2x8xf32> to vector<1x8xf32>
    %15 = arith.mulf %13, %13 : vector<1x8xf32>
    %16 = arith.subf %14, %15 : vector<1x8xf32>
    %cst_10 = arith.constant 0.000000e+00 : f32
    %17 = vector.broadcast %cst_10 : f32 to vector<1x8xf32>
    %18 = arith.maximumf %16, %17 : vector<1x8xf32>
    %cst_11 = arith.constant 9.99999974E-6 : f32
    %19 = vector.broadcast %cst_11 : f32 to vector<1x8xf32>
    %20 = arith.addf %18, %19 : vector<1x8xf32>
    %21 = math.rsqrt %20 : vector<1x8xf32>
    %22 = tpu.concatenate %13, %21 in 0 : vector<1x8xf32>, vector<1x8xf32> -> vector<2x8xf32>
    %c0_12 = arith.constant 0 : index
    %c0_13 = arith.constant 0 : index
    %23 = vector.load %arg4[%c0_12, %c0_13] : memref<8x256xf32, #tpu.memory_space<vmem>>, vector<8x256xf32>
    %cst_14 = arith.constant dense<0.000000e+00> : vector<2x256xf32>
    %24 = tpu.matmul %22, %23, %cst_14 {dimension_numbers = #tpu.dot_dimension_numbers<[1], [0], [0], [1], [0, 0, 1, 1], [], []>} : vector<2x8xf32>, vector<8x256xf32>, vector<2x256xf32> -> vector<2x256xf32>
    %25 = vector.extract_strided_slice %24 {offsets = [0, 0], sizes = [1, 256], strides = [1, 1]} : vector<2x256xf32> to vector<1x256xf32>
    %26 = vector.shape_cast %25 : vector<1x256xf32> to vector<1x1x256xf32>
    %27 = vector.extract_strided_slice %24 {offsets = [1, 0], sizes = [1, 256], strides = [1, 1]} : vector<2x256xf32> to vector<1x256xf32>
    %28 = vector.shape_cast %27 : vector<1x256xf32> to vector<1x1x256xf32>
    %29 = vector.broadcast %26 : vector<1x1x256xf32> to vector<1x32x256xf32>
    %30 = arith.subf %4, %29 : vector<1x32x256xf32>
    %31 = vector.broadcast %28 : vector<1x1x256xf32> to vector<1x32x256xf32>
    %32 = arith.mulf %30, %31 : vector<1x32x256xf32>
    %cst_15 = arith.constant 0.000000e+00 : f32
    %33 = vector.broadcast %cst_15 : f32 to vector<1x32x256xf32>
    %34 = arith.maximumf %32, %33 : vector<1x32x256xf32>
    %c0_16 = arith.constant 0 : index
    %c0_17 = arith.constant 0 : index
    %c0_18 = arith.constant 0 : index
    %35 = vector.load %arg5[%c0_16, %c0_17, %c0_18] : memref<1x32x256xf32, #tpu.memory_space<vmem>>, vector<1x32x256xf32>
    tpu.vector_store %arg5[%c0_16, %c0_17, %c0_18], %34 {strides = array<i32>} : memref<1x32x256xf32, #tpu.memory_space<vmem>>, vector<1x32x256xf32>,
    return
  }
  func.func @transform_0(%arg0: i32) -> (i32, i32, i32) {
    %c0_i32 = arith.constant 0 : i32
    %c0_i32_0 = arith.constant 0 : i32
    %c0_i32_1 = arith.constant 0 : i32
    return %arg0, %c0_i32, %c0_i32_0 : i32, i32, i32
  }
  func.func @transform_1(%arg0: i32) -> (i32, i32) {
    %c0_i32 = arith.constant 0 : i32
    %c0_i32_0 = arith.constant 0 : i32
    %c0_i32_1 = arith.constant 0 : i32
    return %c0_i32, %c0_i32_0 : i32, i32
  }
  func.func @transform_2(%arg0: i32) -> (i32, i32) {
    %c0_i32 = arith.constant 0 : i32
    %c0_i32_0 = arith.constant 0 : i32
    %c0_i32_1 = arith.constant 0 : i32
    return %c0_i32, %c0_i32_0 : i32, i32
  }
  func.func @transform_3(%arg0: i32) -> (i32, i32) {
    %c0_i32 = arith.constant 0 : i32
    %c0_i32_0 = arith.constant 0 : i32
    %c0_i32_1 = arith.constant 0 : i32
    return %c0_i32, %c0_i32_0 : i32, i32
  }
  func.func @transform_4(%arg0: i32) -> (i32, i32, i32) {
    %c0_i32 = arith.constant 0 : i32
    %c0_i32_0 = arith.constant 0 : i32
    %c0_i32_1 = arith.constant 0 : i32
    return %arg0, %c0_i32, %c0_i32_0 : i32, i32, i32
  }
}

</mosaic_0001>

<llo_original>
// kernel: upconv2d_block.1
$region0: #{upconv2d_block.1}
  #allocation0 [shape = 'u32[]', space=smem, size = 0x4, offset = 0x4, fixed_abs, tag = 'smem constant byte address 0x4 - core index']
  #allocation1 [shape = 'u32[72,128]{1,0:T(1,128)}', space=vmem, size = 0x9000, scoped, tag = 'internal scratch']
  %s0 = inlined_call_operand.vmem [shape: f32[2,32,256], index: 0, kind: input, shape index: {}]
  %s1 = inlined_call_operand.vmem [shape: f32[256,256], index: 1, kind: input, shape index: {}]
  %s2 = inlined_call_operand.vmem [shape: f32[256,8], index: 2, kind: input, shape index: {}]
  %s3 = inlined_call_operand.vmem [shape: f32[8,256], index: 3, kind: input, shape index: {}]
  %s4 = inlined_call_operand.vmem [shape: f32[2,32,256], index: 4, kind: output, shape index: {}]
  %s5 = sld [smem:[#allocation0]]
  $region49: #{upconv2d_block.1} parent=0
    _
  %s7 = ssub.s32 1, %s5
  %s8 = scalar_select 0, %s7, %s5
  loop: start=0, step=1, limit=4
  $region2: #{upconv2d_block.1} parent=0 // loop_pre_header
    _
  $region3: #{upconv2d_block.1} parent=0 // loop_header
    %s10 = sphi 0, %s14
    %p11 = scmp.ge.s32.totalorder %s10, 4
    %s20 = sphi 0, %s22
    %s23 = sphi 0, %s20
    %s24 = sphi 0, %s23
    %s40 = sphi 0, %s24
    %s44 = sphi 0, %s44
    %s46 = sphi 0, %s44
    %s47 = sphi 0, %s46
    %s61 = sphi 0, %s47
    %s65 = sphi 0, %s65
    %s67 = sphi 0, %s65
    %s68 = sphi 0, %s67
    %s82 = sphi 0, %s68
    %s86 = sphi 0, %s86
    %s88 = sphi 0, %s86
    %s89 = sphi 0, %s88
    %s103 = sphi 0, %s89
    %s109 = sphi 0, %s111
    %s112 = sphi 0, %s109
    %s113 = sphi 0, %s112
    %s129 = sphi 0, %s113
  $region4: #{upconv2d_block.1} parent=0 // loop_header_branch
    %13 = sbr.rel (%p11) target = $region8
  $region5: #{upconv2d_block.1} parent=0 // loop_body
    %s15 = ssub.s32 %s10, 1
    %s16 = ssub.s32 %s10, 2
    %s17 = sadd.s32 %s10, 1
    %s18 = ssub.s32 %s10, %s17
    %p19 = scmp.eq.s32.totalorder %s18, 0
    %s21 = sadd.s32 %s20, 1
    %s22 = scalar_select %p19, %s20, %s21
    %p25 = pneg %p19
    %p26 = scmp.eq.s32.totalorder %s10, 1
    %p27 = por %p25, %p26
    %p28 = scmp.ne.s32.totalorder %s20, %s23
    %p29 = scmp.eq.s32.totalorder %s10, 0
    %p30 = por %p28, %p29
    %p31 = scmp.ne.s32.totalorder %s20, %s23
    %p32 = scmp.eq.s32.totalorder %s15, 1
    %p33 = por %p31, %p32
    %p34 = scmp.ne.s32.totalorder %s23, %s24
    %p35 = scmp.eq.s32.totalorder %s15, 0
    %p36 = por %p34, %p35
    %p37 = scmp.ne.s32.totalorder %s23, %s24
    %p38 = scmp.eq.s32.totalorder %s16, 1
    %p39 = por %p37, %p38
    %p41 = scmp.ne.s32.totalorder %s24, %s40
    %p42 = scmp.eq.s32.totalorder %s16, 0
    %p43 = por %p41, %p42
    %s45 = sadd.s32 %s44, 1
    %p48 = scmp.eq.s32.totalorder %s10, 1
    %p49 = scmp.ne.s32.totalorder %s44, %s46
    %p50 = scmp.eq.s32.totalorder %s10, 0
    %p51 = por %p49, %p50
    %p52 = scmp.ne.s32.totalorder %s44, %s46
    %p53 = scmp.eq.s32.totalorder %s15, 1
    %p54 = por %p52, %p53
    %p55 = scmp.ne.s32.totalorder %s46, %s47
    %p56 = scmp.eq.s32.totalorder %s15, 0
    %p57 = por %p55, %p56
    %p58 = scmp.ne.s32.totalorder %s46, %s47
    %p59 = scmp.eq.s32.totalorder %s16, 1
    %p60 = por %p58, %p59
    %p62 = scmp.ne.s32.totalorder %s47, %s61
    %p63 = scmp.eq.s32.totalorder %s16, 0
    %p64 = por %p62, %p63
    %s66 = sadd.s32 %s65, 1
    %p69 = scmp.eq.s32.totalorder %s10, 1
    %p70 = scmp.ne.s32.totalorder %s65, %s67
    %p71 = scmp.eq.s32.totalorder %s10, 0
    %p72 = por %p70, %p71
    %p73 = scmp.ne.s32.totalorder %s65, %s67
    %p74 = scmp.eq.s32.totalorder %s15, 1
    %p75 = por %p73, %p74
    %p76 = scmp.ne.s32.totalorder %s67, %s68
    %p77 = scmp.eq.s32.totalorder %s15, 0
    %p78 = por %p76, %p77
    %p79 = scmp.ne.s32.totalorder %s67, %s68
    %p80 = scmp.eq.s32.totalorder %s16, 1
    %p81 = por %p79, %p80
    %p83 = scmp.ne.s32.totalorder %s68, %s82
    %p84 = scmp.eq.s32.totalorder %s16, 0
    %p85 = por %p83, %p84
    %s87 = sadd.s32 %s86, 1
    %p90 = scmp.eq.s32.totalorder %s10, 1
    %p91 = scmp.ne.s32.totalorder %s86, %s88
    %p92 = scmp.eq.s32.totalorder %s10, 0
    %p93 = por %p91, %p92
    %p94 = scmp.ne.s32.totalorder %s86, %s88
    %p95 = scmp.eq.s32.totalorder %s15, 1
    %p96 = por %p94, %p95
    %p97 = scmp.ne.s32.totalorder %s88, %s89
    %p98 = scmp.eq.s32.totalorder %s15, 0
    %p99 = por %p97, %p98
    %p100 = scmp.ne.s32.totalorder %s88, %s89
    %p101 = scmp.eq.s32.totalorder %s16, 1
    %p102 = por %p100, %p101
    %p104 = scmp.ne.s32.totalorder %s89, %s103
    %p105 = scmp.eq.s32.totalorder %s16, 0
    %p106 = por %p104, %p105
    %s107 = ssub.s32 %s10, %s17
    %p108 = scmp.eq.s32.totalorder %s107, 0
    %s110 = sadd.s32 %s109, 1
    %s111 = scalar_select %p108, %s109, %s110
    %p114 = pneg %p108
    %p115 = scmp.eq.s32.totalorder %s10, 1
    %p116 = por %p114, %p115
    %p117 = scmp.ne.s32.totalorder %s109, %s112
    %p118 = scmp.eq.s32.totalorder %s10, 0
    %p119 = por %p117, %p118
    %p120 = scmp.ne.s32.totalorder %s109, %s112
    %p121 = scmp.eq.s32.totalorder %s15, 1
    %p122 = por %p120, %p121
    %p123 = scmp.ne.s32.totalorder %s112, %s113
    %p124 = scmp.eq.s32.totalorder %s15, 0
    %p125 = por %p123, %p124
    %p126 = scmp.ne.s32.totalorder %s112, %s113
    %p127 = scmp.eq.s32.totalorder %s16, 1
    %p128 = por %p126, %p127
    %p130 = scmp.ne.s32.totalorder %s113, %s129
    %p131 = scmp.eq.s32.totalorder %s16, 0
    %p132 = por %p130, %p131
    %p133 = scmp.le.s32.totalorder 1, %s10
    %p134 = scmp.lt.s32.totalorder %s10, 3
    %p135 = pnand %p133, %p134
    %p136 = pneg %p135
    // Predicated region
    $region9: #{upconv2d_block.1} parent=5 // pred_check
      _
    $region10: #{upconv2d_block.1} parent=5 // pred_check_branch
      %138 = sbr.rel (%p135) target = $region12
    $region11: #{upconv2d_block.1} parent=5 // pred_region
      %s139 = ssub.s32 %s10, 1
      // Predicated region
      $region13: #{upconv2d_block.1} parent=11 // pred_check
        %p140 = pneg %p57
      $region14: #{upconv2d_block.1} parent=11 // pred_check_branch
        %142 = sbr.rel (%p140) target = $region16
      $region15: #{upconv2d_block.1} parent=11 // pred_region
        _
      $region16: #{upconv2d_block.1} parent=11 // pred_fallthru
        _
      // Predicated region
      $region17: #{upconv2d_block.1} parent=11 // pred_check
        %p143 = pneg %p78
      $region18: #{upconv2d_block.1} parent=11 // pred_check_branch
        %145 = sbr.rel (%p143) target = $region20
      $region19: #{upconv2d_block.1} parent=11 // pred_region
        _
      $region20: #{upconv2d_block.1} parent=11 // pred_fallthru
        _
      // Predicated region
      $region21: #{upconv2d_block.1} parent=11 // pred_check
        %p146 = pneg %p99
      $region22: #{upconv2d_block.1} parent=11 // pred_check_branch
        %148 = sbr.rel (%p146) target = $region24
      $region23: #{upconv2d_block.1} parent=11 // pred_region
        _
      $region24: #{upconv2d_block.1} parent=11 // pred_fallthru
        _
    $region12: #{upconv2d_block.1} parent=5 // pred_fallthru
      _
    %p149 = scmp.lt.s32.totalorder %s10, 2
    // Predicated region
    $region25: #{upconv2d_block.1} parent=5 // pred_check
      %p150 = pneg %p149
    $region26: #{upconv2d_block.1} parent=5 // pred_check_branch
      %152 = sbr.rel (%p150) target = $region28
    $region27: #{upconv2d_block.1} parent=5 // pred_region
      // Predicated region
      $region29: #{upconv2d_block.1} parent=27 // pred_check
        %p153 = pneg %p30
      $region30: #{upconv2d_block.1} parent=27 // pred_check_branch
        %155 = sbr.rel (%p153) target = $region32
      $region31: #{upconv2d_block.1} parent=27 // pred_region
        %p156 = scmp.lt.s32.totalorder %s10, 1
        %s157 = scalar_select %p156, %s10, 1
        %s158 = smul.addr %s157, 8
        %s159 = smul.addr %s158, 8
        %s160 = scalar_lea.vmem %s0, %s159
      $region32: #{upconv2d_block.1} parent=27 // pred_fallthru
        _
    $region28: #{upconv2d_block.1} parent=5 // pred_fallthru
      _
    %p161 = scmp.le.s32.totalorder 1, %s10
    %p162 = scmp.lt.s32.totalorder %s10, 3
    %p163 = pnand %p161, %p162
    %p164 = pneg %p163
    // Predicated region
    $region33: #{upconv2d_block.1} parent=5 // pred_check
      _
    $region34: #{upconv2d_block.1} parent=5 // pred_check_branch
      %166 = sbr.rel (%p163) target = $region36
    $region35: #{upconv2d_block.1} parent=5 // pred_region
      %s167 = ssub.s32 %s10, 1
      %p168 = scmp.lt.s32.totalorder %s15, 1
      %s169 = scalar_select %p168, %s15, 1
      %s170 = smul.addr %s169, 8
      %s171 = smul.addr %s170, 8
      %s172 = scalar_lea.vmem %s0, %s171
      %p173 = pneg %p36
      %p174 = pneg %p33
      %p175 = pneg %p57
      %p176 = pneg %p54
      %p177 = pneg %p78
      %p178 = pneg %p75
      %p179 = pneg %p99
      %p180 = pneg %p96
      %p181 = pneg %p125
      %p182 = pneg %p122
      %p183 = scmp.lt.s32.totalorder %s15, 1
      %s184 = scalar_select %p183, %s15, 1
      %s185 = smul.addr %s184, 8
      %s186 = smul.addr %s185, 8
      %s187 = scalar_lea.vmem %s4, %s186
      %p188 = scmp.lt.s32.totalorder %s15, 1
      %s189 = scalar_select %p188, %s15, 1
      %s190 = smul.addr %s189, 8
      %s191 = smul.addr %s190, 8
      %s192 = scalar_lea.vmem %s0, %s191
      %p193 = scmp.lt.s32.totalorder %s15, 1
      %s194 = scalar_select %p193, %s15, 1
      %s195 = smul.addr %s194, 8
      %s196 = smul.addr %s195, 8
      %s197 = scalar_lea.vmem %s4, %s196
      %v198 = vld [vmem:[%s192] sm:$0xff]
      %v199 = vld [vmem:[%s192 + $0x8] sm:$0xff]
      %v200 = vld [vmem:[%s192 + $0x10] sm:$0xff]
      %v201 = vld [vmem:[%s192 + $0x18] sm:$0xff]
      %v202 = vld [vmem:[%s192 + $0x20] sm:$0xff]
      %v203 = vld [vmem:[%s192 + $0x28] sm:$0xff]
      %v204 = vld [vmem:[%s192 + $0x30] sm:$0xff]
      %v205 = vld [vmem:[%s192 + $0x38] sm:$0xff]
      %v206 = vld [vmem:[%s1] sm:$0xff]
      %v207 = vld [vmem:[%s1 + $0x8] sm:$0xff]
      %v208 = vld [vmem:[%s1 + $0x10] sm:$0xff]
      %v209 = vld [vmem:[%s1 + $0x18] sm:$0xff]
      %v210 = vld [vmem:[%s1 + $0x20] sm:$0xff]
      %v211 = vld [vmem:[%s1 + $0x28] sm:$0xff]
      %v212 = vld [vmem:[%s1 + $0x30] sm:$0xff]
      %v213 = vld [vmem:[%s1 + $0x38] sm:$0xff]
      %v214 = vld [vmem:[%s1 + $0x40] sm:$0xff]
      %v215 = vld [vmem:[%s1 + $0x48] sm:$0xff]
      %v216 = vld [vmem:[%s1 + $0x50] sm:$0xff]
      %v217 = vld [vmem:[%s1 + $0x58] sm:$0xff]
      %v218 = vld [vmem:[%s1 + $0x60] sm:$0xff]
      %v219 = vld [vmem:[%s1 + $0x68] sm:$0xff]
      %v220 = vld [vmem:[%s1 + $0x70] sm:$0xff]
      %v221 = vld [vmem:[%s1 + $0x78] sm:$0xff]
      %v222 = vld [vmem:[%s1 + $0x80] sm:$0xff]
      %v223 = vld [vmem:[%s1 + $0x88] sm:$0xff]
      %v224 = vld [vmem:[%s1 + $0x90] sm:$0xff]
      %v225 = vld [vmem:[%s1 + $0x98] sm:$0xff]
      %v226 = vld [vmem:[%s1 + $0xa0] sm:$0xff]
      %v227 = vld [vmem:[%s1 + $0xa8] sm:$0xff]
      %v228 = vld [vmem:[%s1 + $0xb0] sm:$0xff]
      %v229 = vld [vmem:[%s1 + $0xb8] sm:$0xff]
      %v230 = vld [vmem:[%s1 + $0xc0] sm:$0xff]
      %v231 = vld [vmem:[%s1 + $0xc8] sm:$0xff]
      %v232 = vld [vmem:[%s1 + $0xd0] sm:$0xff]
      %v233 = vld [vmem:[%s1 + $0xd8] sm:$0xff]
      %v234 = vld [vmem:[%s1 + $0xe0] sm:$0xff]
      %v235 = vld [vmem:[%s1 + $0xe8] sm:$0xff]
      %v236 = vld [vmem:[%s1 + $0xf0] sm:$0xff]
      %v237 = vld [vmem:[%s1 + $0xf8] sm:$0xff]
      %v238 = vld [vmem:[%s1 + $0x100] sm:$0xff]
      %v239 = vld [vmem:[%s1 + $0x108] sm:$0xff]
      %v240 = vld [vmem:[%s1 + $0x110] sm:$0xff]
      %v241 = vld [vmem:[%s1 + $0x118] sm:$0xff]
      %v242 = vld [vmem:[%s1 + $0x120] sm:$0xff]
      %v243 = vld [vmem:[%s1 + $0x128] sm:$0xff]
      %v244 = vld [vmem:[%s1 + $0x130] sm:$0xff]
      %v245 = vld [vmem:[%s1 + $0x138] sm:$0xff]
      %v246 = vld [vmem:[%s1 + $0x140] sm:$0xff]
      %v247 = vld [vmem:[%s1 + $0x148] sm:$0xff]
      %v248 = vld [vmem:[%s1 + $0x150] sm:$0xff]
      %v249 = vld [vmem:[%s1 + $0x158] sm:$0xff]
      %v250 = vld [vmem:[%s1 + $0x160] sm:$0xff]
      %v251 = vld [vmem:[%s1 + $0x168] sm:$0xff]
      %v252 = vld [vmem:[%s1 + $0x170] sm:$0xff]
      %v253 = vld [vmem:[%s1 + $0x178] sm:$0xff]
      %v254 = vld [vmem:[%s1 + $0x180] sm:$0xff]
      %v255 = vld [vmem:[%s1 + $0x188] sm:$0xff]
      %v256 = vld [vmem:[%s1 + $0x190] sm:$0xff]
      %v257 = vld [vmem:[%s1 + $0x198] sm:$0xff]
      %v258 = vld [vmem:[%s1 + $0x1a0] sm:$0xff]
      %v259 = vld [vmem:[%s1 + $0x1a8] sm:$0xff]
      %v260 = vld [vmem:[%s1 + $0x1b0] sm:$0xff]
      %v261 = vld [vmem:[%s1 + $0x1b8] sm:$0xff]
      %v262 = vld [vmem:[%s1 + $0x1c0] sm:$0xff]
      %v263 = vld [vmem:[%s1 + $0x1c8] sm:$0xff]
      %v264 = vld [vmem:[%s1 + $0x1d0] sm:$0xff]
      %v265 = vld [vmem:[%s1 + $0x1d8] sm:$0xff]
      %v266 = vld [vmem:[%s1 + $0x1e0] sm:$0xff]
      %v267 = vld [vmem:[%s1 + $0x1e8] sm:$0xff]
      %v268 = vld [vmem:[%s1 + $0x1f0] sm:$0xff]
      %v269 = vld [vmem:[%s1 + $0x1f8] sm:$0xff]
      %270 = vmatpush.msra.mxu0 %v236
      %271 = vmatpush.msra.mxu0 %v234
      %272 = vmatpush.msra.mxu0 %v232
      %273 = vmatpush.msra.mxu0 %v230
      %274 = vmatpush.msra.mxu0 %v228
      %275 = vmatpush.msra.mxu0 %v226
      %276 = vmatpush.msra.mxu0 %v224
      %277 = vmatpush.msra.mxu0 %v222
      %278 = vmatpush.msra.mxu0 %v220
      %279 = vmatpush.msra.mxu0 %v218
      %280 = vmatpush.msra.mxu0 %v216
      %281 = vmatpush.msra.mxu0 %v214
      %282 = vmatpush.msra.mxu0 %v212
      %283 = vmatpush.msra.mxu0 %v210
      %284 = vmatpush.msra.mxu0 %v208
      %285 = vmatpush.msra.mxu0 %v206
      %286 = vmatmul.f32.gmra.mxu0 %v198
      %v287 = vpop.f32.mrf.mxu0
      %v288 = vadd.f32 0.0, %v287
      %289 = vmatmul.f32.gmra.mxu0 %v200
      %v290 = vpop.f32.mrf.mxu0
      %v291 = vadd.f32 0.0, %v290
      %292 = vmatmul.f32.gmra.mxu0 %v202
      %v293 = vpop.f32.mrf.mxu0
      %v294 = vadd.f32 0.0, %v293
      %295 = vmatmul.f32.gmra.mxu0 %v204
      %v296 = vpop.f32.mrf.mxu0
      %v297 = vadd.f32 0.0, %v296
      %298 = vdwg.mxu0
      %299 = vmatpush.msra.mxu0 %v268
      %300 = vmatpush.msra.mxu0 %v266
      %301 = vmatpush.msra.mxu0 %v264
      %302 = vmatpush.msra.mxu0 %v262
      %303 = vmatpush.msra.mxu0 %v260
      %304 = vmatpush.msra.mxu0 %v258
      %305 = vmatpush.msra.mxu0 %v256
      %306 = vmatpush.msra.mxu0 %v254
      %307 = vmatpush.msra.mxu0 %v252
      %308 = vmatpush.msra.mxu0 %v250
      %309 = vmatpush.msra.mxu0 %v248
      %310 = vmatpush.msra.mxu0 %v246
      %311 = vmatpush.msra.mxu0 %v244
      %312 = vmatpush.msra.mxu0 %v242
      %313 = vmatpush.msra.mxu0 %v240
      %314 = vmatpush.msra.mxu0 %v238
      %315 = vmatmul.f32.gmra.mxu0 %v199
      %v316 = vpop.f32.mrf.mxu0
      %v317 = vadd.f32 %v288, %v316
      %318 = vmatmul.f32.gmra.mxu0 %v201
      %v319 = vpop.f32.mrf.mxu0
      %v320 = vadd.f32 %v291, %v319
      %321 = vmatmul.f32.gmra.mxu0 %v203
      %v322 = vpop.f32.mrf.mxu0
      %v323 = vadd.f32 %v294, %v322
      %324 = vmatmul.f32.gmra.mxu0 %v205
      %v325 = vpop.f32.mrf.mxu0
      %v326 = vadd.f32 %v297, %v325
      %327 = vdwg.mxu0
      %328 = vmatpush.msra.mxu0 %v237
      %329 = vmatpush.msra.mxu0 %v235
      %330 = vmatpush.msra.mxu0 %v233
      %331 = vmatpush.msra.mxu0 %v231
      %332 = vmatpush.msra.mxu0 %v229
      %333 = vmatpush.msra.mxu0 %v227
      %334 = vmatpush.msra.mxu0 %v225
      %335 = vmatpush.msra.mxu0 %v223
      %336 = vmatpush.msra.mxu0 %v221
      %337 = vmatpush.msra.mxu0 %v219
      %338 = vmatpush.msra.mxu0 %v217
      %339 = vmatpush.msra.mxu0 %v215
      %340 = vmatpush.msra.mxu0 %v213
      %341 = vmatpush.msra.mxu0 %v211
      %342 = vmatpush.msra.mxu0 %v209
      %343 = vmatpush.msra.mxu0 %v207
      %344 = vmatmul.f32.gmra.mxu0 %v198
      %v345 = vpop.f32.mrf.mxu0
      %v346 = vadd.f32 0.0, %v345
      %347 = vmatmul.f32.gmra.mxu0 %v200
      %v348 = vpop.f32.mrf.mxu0
      %v349 = vadd.f32 0.0, %v348
      %350 = vmatmul.f32.gmra.mxu0 %v202
      %v351 = vpop.f32.mrf.mxu0
      %v352 = vadd.f32 0.0, %v351
      %353 = vmatmul.f32.gmra.mxu0 %v204
      %v354 = vpop.f32.mrf.mxu0
      %v355 = vadd.f32 0.0, %v354
      %356 = vdwg.mxu0
      %357 = vmatpush.msra.mxu0 %v269
      %358 = vmatpush.msra.mxu0 %v267
      %359 = vmatpush.msra.mxu0 %v265
      %360 = vmatpush.msra.mxu0 %v263
      %361 = vmatpush.msra.mxu0 %v261
      %362 = vmatpush.msra.mxu0 %v259
      %363 = vmatpush.msra.mxu0 %v257
      %364 = vmatpush.msra.mxu0 %v255
      %365 = vmatpush.msra.mxu0 %v253
      %366 = vmatpush.msra.mxu0 %v251
      %367 = vmatpush.msra.mxu0 %v249
      %368 = vmatpush.msra.mxu0 %v247
      %369 = vmatpush.msra.mxu0 %v245
      %370 = vmatpush.msra.mxu0 %v243
      %371 = vmatpush.msra.mxu0 %v241
      %372 = vmatpush.msra.mxu0 %v239
      %373 = vmatmul.f32.gmra.mxu0 %v199
      %v374 = vpop.f32.mrf.mxu0
      %v375 = vadd.f32 %v346, %v374
      %376 = vmatmul.f32.gmra.mxu0 %v201
      %v377 = vpop.f32.mrf.mxu0
      %v378 = vadd.f32 %v349, %v377
      %379 = vmatmul.f32.gmra.mxu0 %v203
      %v380 = vpop.f32.mrf.mxu0
      %v381 = vadd.f32 %v352, %v380
      %382 = vmatmul.f32.gmra.mxu0 %v205
      %v383 = vpop.f32.mrf.mxu0
      %v384 = vadd.f32 %v355, %v383
      %385 = vdwg.mxu0
      %v386 = vadd.f32 %v317, %v320
      %v387 = vadd.f32 %v386, %v323
      %v388 = vadd.f32 %v387, %v326
      %v389 = vrot.slane %v388, 4
      %v390 = vadd.f32 %v388, %v389
      %v391 = vrot.slane %v390, 2
      %v392 = vadd.f32 %v390, %v391
      %v393 = vrot.slane %v392, 1
      %v394 = vadd.f32 %v392, %v393
      %v395 = vadd.f32 %v375, %v378
      %v396 = vadd.f32 %v395, %v381
      %v397 = vadd.f32 %v396, %v384
      %v398 = vrot.slane %v397, 4
      %v399 = vadd.f32 %v397, %v398
      %v400 = vrot.slane %v399, 2
      %v401 = vadd.f32 %v399, %v400
      %v402 = vrot.slane %v401, 1
      %v403 = vadd.f32 %v401, %v402
      %v404 = vmul.f32 %v317, %v317
      %v405 = vmul.f32 %v375, %v375
      %v406 = vmul.f32 %v320, %v320
      %v407 = vmul.f32 %v378, %v378
      %v408 = vmul.f32 %v323, %v323
      %v409 = vmul.f32 %v381, %v381
      %v410 = vmul.f32 %v326, %v326
      %v411 = vmul.f32 %v384, %v384
      %v412 = vadd.f32 %v404, %v406
      %v413 = vadd.f32 %v412, %v408
      %v414 = vadd.f32 %v413, %v410
      %v415 = vrot.slane %v414, 4
      %v416 = vadd.f32 %v414, %v415
      %v417 = vrot.slane %v416, 2
      %v418 = vadd.f32 %v416, %v417
      %v419 = vrot.slane %v418, 1
      %v420 = vadd.f32 %v418, %v419
      %v421 = vadd.f32 %v405, %v407
      %v422 = vadd.f32 %v421, %v409
      %v423 = vadd.f32 %v422, %v411
      %v424 = vrot.slane %v423, 4
      %v425 = vadd.f32 %v423, %v424
      %v426 = vrot.slane %v425, 2
      %v427 = vadd.f32 %v425, %v426
      %v428 = vrot.slane %v427, 1
      %v429 = vadd.f32 %v427, %v428
      %vm430 = vcmask 1040384
      %v431 = vsel %vm430, %v394, %v420
      %v432 = vsel %vm430, %v403, %v429
      %v433 = vld [vmem:[%s2] sm:$0xff]
      %v434 = vld [vmem:[%s2 + $0x8] sm:$0xff]
      %v435 = vld [vmem:[%s2 + $0x10] sm:$0xff]
      %v436 = vld [vmem:[%s2 + $0x18] sm:$0xff]
      %v437 = vld [vmem:[%s2 + $0x20] sm:$0xff]
      %v438 = vld [vmem:[%s2 + $0x28] sm:$0xff]
      %v439 = vld [vmem:[%s2 + $0x30] sm:$0xff]
      %v440 = vld [vmem:[%s2 + $0x38] sm:$0xff]
      %v441 = vld [vmem:[%s2 + $0x40] sm:$0xff]
      %v442 = vld [vmem:[%s2 + $0x48] sm:$0xff]
      %v443 = vld [vmem:[%s2 + $0x50] sm:$0xff]
      %v444 = vld [vmem:[%s2 + $0x58] sm:$0xff]
      %v445 = vld [vmem:[%s2 + $0x60] sm:$0xff]
      %v446 = vld [vmem:[%s2 + $0x68] sm:$0xff]
      %v447 = vld [vmem:[%s2 + $0x70] sm:$0xff]
      %v448 = vld [vmem:[%s2 + $0x78] sm:$0xff]
      %v449 = vld [vmem:[%s2 + $0x80] sm:$0xff]
      %v450 = vld [vmem:[%s2 + $0x88] sm:$0xff]
      %v451 = vld [vmem:[%s2 + $0x90] sm:$0xff]
      %v452 = vld [vmem:[%s2 + $0x98] sm:$0xff]
      %v453 = vld [vmem:[%s2 + $0xa0] sm:$0xff]
      %v454 = vld [vmem:[%s2 + $0xa8] sm:$0xff]
      %v455 = vld [vmem:[%s2 + $0xb0] sm:$0xff]
      %v456 = vld [vmem:[%s2 + $0xb8] sm:$0xff]
      %v457 = vld [vmem:[%s2 + $0xc0] sm:$0xff]
      %v458 = vld [vmem:[%s2 + $0xc8] sm:$0xff]
      %v459 = vld [vmem:[%s2 + $0xd0] sm:$0xff]
      %v460 = vld [vmem:[%s2 + $0xd8] sm:$0xff]
      %v461 = vld [vmem:[%s2 + $0xe0] sm:$0xff]
      %v462 = vld [vmem:[%s2 + $0xe8] sm:$0xff]
      %v463 = vld [vmem:[%s2 + $0xf0] sm:$0xff]
      %v464 = vld [vmem:[%s2 + $0xf8] sm:$0xff]
      %465 = vmatpush.msra.mxu0 %v448
      %466 = vmatpush.msra.mxu0 %v447
      %467 = vmatpush.msra.mxu0 %v446
      %468 = vmatpush.msra.mxu0 %v445
      %469 = vmatpush.msra.mxu0 %v444
      %470 = vmatpush.msra.mxu0 %v443
      %471 = vmatpush.msra.mxu0 %v442
      %472 = vmatpush.msra.mxu0 %v441
      %473 = vmatpush.msra.mxu0 %v440
      %474 = vmatpush.msra.mxu0 %v439
      %475 = vmatpush.msra.mxu0 %v438
      %476 = vmatpush.msra.mxu0 %v437
      %477 = vmatpush.msra.mxu0 %v436
      %478 = vmatpush.msra.mxu0 %v435
      %479 = vmatpush.msra.mxu0 %v434
      %480 = vmatpush.msra.mxu0 %v433
      %481 = vmatmul.f32.gmra.mxu0 %v431
      %v482 = vpop.f32.mrf.mxu0
      %v483 = vadd.f32 0.0, %v482
      %484 = vdwg.mxu0
      %485 = vmatpush.msra.mxu0 %v464
      %486 = vmatpush.msra.mxu0 %v463
      %487 = vmatpush.msra.mxu0 %v462
      %488 = vmatpush.msra.mxu0 %v461
      %489 = vmatpush.msra.mxu0 %v460
      %490 = vmatpush.msra.mxu0 %v459
      %491 = vmatpush.msra.mxu0 %v458
      %492 = vmatpush.msra.mxu0 %v457
      %493 = vmatpush.msra.mxu0 %v456
      %494 = vmatpush.msra.mxu0 %v455
      %495 = vmatpush.msra.mxu0 %v454
      %496 = vmatpush.msra.mxu0 %v453
      %497 = vmatpush.msra.mxu0 %v452
      %498 = vmatpush.msra.mxu0 %v451
      %499 = vmatpush.msra.mxu0 %v450
      %500 = vmatpush.msra.mxu0 %v449
      %501 = vmatmul.f32.gmra.mxu0 %v432
      %v502 = vpop.f32.mrf.mxu0
      %v503 = vadd.f32 %v483, %v502
      %504 = vdwg.mxu0
      %v505 = vmul.f32 %v503, 0.0009765625
      %v506 = vmul.f32 %v505, %v505
      %v508 = vrot.slane %v506, 7
      %v510 = vsub.f32 %v505, %v508
      %v511 = vmax.f32 %v510, 0.0
      %v512 = vadd.f32 %v511, 1e-05
      %v513 = vrsqrt.pop %v512
      %v514 = vmul.f32 %v513, %v512
      %v515 = vmul.f32 %v514, %v513
      %v516 = vmul.f32 0.5, %v515
      %v517 = vsub.f32 1.5, %v516
      %v518 = vmul.f32 %v513, %v517
      %vm519 = vweird.f32 %v512
      %vm520 = vweird.f32 %v513
      %vm521 = vmor %vm519, %vm520
      %v522 = vsel %vm521, %v513, %v518
      %v523 = vsel %vm430, %v505, %v522
      %v524 = vld [vmem:[%s3] sm:$0xff]
      %v525 = vld [vmem:[%s3 + $0x8] sm:$0xff]
      %vm526 = vcmask 64512
      %v528 = vsel %vm526, %v523, 0
      %530 = vmatpush.msra.mxu0 0.0
      %531 = vmatpush.msra.mxu0 0.0
      %532 = vmatpush.msra.mxu0 0.0
      %533 = vmatpush.msra.mxu0 0.0
      %534 = vmatpush.msra.mxu0 0.0
      %535 = vmatpush.msra.mxu0 0.0
      %536 = vmatpush.msra.mxu0 0.0
      %537 = vmatpush.msra.mxu0 0.0
      %538 = vmatpush.msra.mxu0 0.0
      %539 = vmatpush.msra.mxu0 0.0
      %540 = vmatpush.msra.mxu0 0.0
      %541 = vmatpush.msra.mxu0 0.0
      %542 = vmatpush.msra.mxu0 0.0
      %543 = vmatpush.msra.mxu0 0.0
      %544 = vmatpush.msra.mxu0 0.0
      %545 = vmatpush.msra.mxu0 %v524
      %546 = vmatmul.f32.gmra.mxu0 %v528
      %v547 = vpop.f32.mrf.mxu0
      %v548 = vadd.f32 0.0, %v547
      %549 = vdwg.mxu0
      %550 = vmatpush.msra.mxu0 0.0
      %551 = vmatpush.msra.mxu0 0.0
      %552 = vmatpush.msra.mxu0 0.0
      %553 = vmatpush.msra.mxu0 0.0
      %554 = vmatpush.msra.mxu0 0.0
      %555 = vmatpush.msra.mxu0 0.0
      %556 = vmatpush.msra.mxu0 0.0
      %557 = vmatpush.msra.mxu0 0.0
      %558 = vmatpush.msra.mxu0 0.0
      %559 = vmatpush.msra.mxu0 0.0
      %560 = vmatpush.msra.mxu0 0.0
      %561 = vmatpush.msra.mxu0 0.0
      %562 = vmatpush.msra.mxu0 0.0
      %563 = vmatpush.msra.mxu0 0.0
      %564 = vmatpush.msra.mxu0 0.0
      %565 = vmatpush.msra.mxu0 %v525
      %566 = vmatmul.f32.gmra.mxu0 %v528
      %v567 = vpop.f32.mrf.mxu0
      %v568 = vadd.f32 0.0, %v567
      %569 = vdwg.mxu0
      %v570 = vperm.slane %v548, 0
      %v571 = vperm.slane %v568, 0
      %v572 = vsub.f32 %v317, %v570
      %v573 = vsub.f32 %v375, %v571
      %v574 = vsub.f32 %v320, %v570
      %v575 = vsub.f32 %v378, %v571
      %v576 = vsub.f32 %v323, %v570
      %v577 = vsub.f32 %v381, %v571
      %v578 = vsub.f32 %v326, %v570
      %v579 = vsub.f32 %v384, %v571
      %v580 = vperm.slane %v548, 1
      %v581 = vperm.slane %v568, 1
      %v582 = vmul.f32 %v572, %v580
      %v583 = vmul.f32 %v573, %v581
      %v584 = vmul.f32 %v574, %v580
      %v585 = vmul.f32 %v575, %v581
      %v586 = vmul.f32 %v576, %v580
      %v587 = vmul.f32 %v577, %v581
      %v588 = vmul.f32 %v578, %v580
      %v589 = vmul.f32 %v579, %v581
      %v590 = vmax.f32 %v582, 0.0
      %v591 = vmax.f32 %v583, 0.0
      %v592 = vmax.f32 %v584, 0.0
      %v593 = vmax.f32 %v585, 0.0
      %v594 = vmax.f32 %v586, 0.0
      %v595 = vmax.f32 %v587, 0.0
      %v596 = vmax.f32 %v588, 0.0
      %v597 = vmax.f32 %v589, 0.0
      %598 = vst [vmem:[%s197] sm:$0xff] %v590
      %599 = vst [vmem:[%s197 + $0x8] sm:$0xff] %v591
      %600 = vst [vmem:[%s197 + $0x10] sm:$0xff] %v592
      %601 = vst [vmem:[%s197 + $0x18] sm:$0xff] %v593
      %602 = vst [vmem:[%s197 + $0x20] sm:$0xff] %v594
      %603 = vst [vmem:[%s197 + $0x28] sm:$0xff] %v595
      %604 = vst [vmem:[%s197 + $0x30] sm:$0xff] %v596
      %605 = vst [vmem:[%s197 + $0x38] sm:$0xff] %v597
      %p606 = scmp.lt.s32.totalorder %s15, 1
      %s607 = scalar_select %p606, %s15, 1
      %s608 = smul.addr %s607, 8
      %s609 = smul.addr %s608, 8
      %s610 = scalar_lea.vmem %s4, %s609
      // Predicated region
      $region37: #{upconv2d_block.1} parent=35 // pred_check
        %p611 = pneg %p122
      $region38: #{upconv2d_block.1} parent=35 // pred_check_branch
        %613 = sbr.rel (%p611) target = $region40
      $region39: #{upconv2d_block.1} parent=35 // pred_region
        _
      $region40: #{upconv2d_block.1} parent=35 // pred_fallthru
        _
    $region36: #{upconv2d_block.1} parent=5 // pred_fallthru
      _
    %p614 = scmp.le.s32.totalorder 2, %s10
    // Predicated region
    $region41: #{upconv2d_block.1} parent=5 // pred_check
      %p615 = pneg %p614
    $region42: #{upconv2d_block.1} parent=5 // pred_check_branch
      %617 = sbr.rel (%p615) target = $region44
    $region43: #{upconv2d_block.1} parent=5 // pred_region
      %s618 = ssub.s32 %s10, 2
      // Predicated region
      $region45: #{upconv2d_block.1} parent=43 // pred_check
        %p619 = pneg %p128
      $region46: #{upconv2d_block.1} parent=43 // pred_check_branch
        %621 = sbr.rel (%p619) target = $region48
      $region47: #{upconv2d_block.1} parent=43 // pred_region
        %p622 = scmp.lt.s32.totalorder %s16, 1
        %s623 = scalar_select %p622, %s16, 1
        %s624 = smul.addr %s623, 8
        %s625 = smul.addr %s624, 8
        %s626 = scalar_lea.vmem %s4, %s625
      $region48: #{upconv2d_block.1} parent=43 // pred_fallthru
        _
    $region44: #{upconv2d_block.1} parent=5 // pred_fallthru
      _
  $region6: #{upconv2d_block.1} parent=0 // loop_footer
    %s14 = sadd.s32 1, %s10
  $region7: #{upconv2d_block.1} parent=0 // loop_footer_branch
    %9 = sbr.rel target = $region3
  $region8: #{upconv2d_block.1} parent=0 // loop_exit
    _

</llo_original>
